<compile_context>
chip_gen: v7x
topology: tpu7x:2x2x1
jax: 0.10.0
libtpu: 0.0.40
codegen_flags: <defaults>
</compile_context>

<pallas_src>
import jax
import jax.numpy as jnp
from jax.experimental import pallas as pl
from jax.experimental.pallas import tpu as pltpu


INPUT_FEATURES = 768


def _round_up(x: int, m: int) -> int:
    return ((x + m - 1) // m) * m


def perspective_kernel(x_ref, w1_ref, b1_ref, w2_stm_ref, w2_nstm_ref, b2_ref,
                       o_ref):
    """One batch tile of the forward pass.

    x_ref       : (2, TB, 768) int8   stacked [stm, nstm] dense 0/1 boards
    w1_ref      : (768, F)     bf16   shared feature transformer weight
    b1_ref      : (1, F)       f32    feature transformer bias
    w2_stm_ref  : (1, F)       f32    output-layer weight, stm half (row form)
    w2_nstm_ref : (1, F)       f32    output-layer weight, nstm half (row form)
    b2_ref      : (1, 1)       f32    output-layer bias
    o_ref       : (TB, 1)      f32    sigmoid outputs for this tile
    """
    tb = x_ref.shape[1]

    # int8 -> bf16 cast only (boards are 0/1, exact); no f32 board temporaries.
    x = x_ref[...].astype(jnp.bfloat16)                # (2, TB, 768)
    x2 = x.reshape(2 * tb, INPUT_FEATURES)             # TB % 128 == 0 -> aligned merge

    # Single fused feature-transformer matmul for both perspectives
    # (bf16 MXU, f32 accumulate), then bias + clamp.
    h = jnp.dot(x2, w1_ref[...], preferred_element_type=jnp.float32)  # (2*TB, F)
    h = jnp.clip(h + b1_ref[...], 0.0, 1.0)

    stm = h[:tb, :]                                    # (TB, F) static, aligned slices
    nstm = h[tb:, :]

    # Output layer (2F -> 1) on the VPU/XLU: splitting w2 into stm/nstm halves
    # and summing is exactly h_cat @ w2.T; an N=1 MXU matmul would be wasted.
    prod = stm * w2_stm_ref[...] + nstm * w2_nstm_ref[...]             # (TB, F)
    logits = jnp.sum(prod, axis=-1, keepdims=True) + b2_ref[...]       # (TB, 1)

    # Sigmoid exp goes to the (otherwise idle) EUP slot.
    o_ref[...] = jax.nn.sigmoid(logits)


def perspective_forward(x_stm, x_nstm, w1, b1, w2, b2, *, block_batch=2048):
    """Wrapper: parameter re-layout / padding in plain JAX, hot path in the kernel.

    x_stm, x_nstm : (B, 768) dense 0/1 boards (f32/bf16/int)
    w1 : (F, 768) f32  (torch Linear convention: (out, in))
    b1 : (F,)     f32
    w2 : (1, 2F)  f32
    b2 : (1,)     f32
    returns (B, 1) f32
    """
    B = x_stm.shape[0]
    F = w1.shape[0]

    # Lane-aligned batch tiles (TB multiple of 128) keep the streamed board
    # blocks, the in-kernel (2,TB,768)->(2TB,768) merge and the output column
    # tile-aligned on every generation.
    if B <= 128:
        TB = 128
    elif B <= block_batch:
        # >= 2 tiles so the "parallel" axis can shard across both v7x TensorCores
        # (no-op on single-TC v5e/v6e).
        TB = _round_up(pl.cdiv(B, 2), 128)
    else:
        TB = max(128, (block_batch // 128) * 128)
    B_pad = _round_up(B, TB)
    num_tiles = B_pad // TB

    def _prep_board(x):
        # Contract: boards are exactly 0/1 -> int8 transport is lossless and
        # quarters HBM bytes vs f32 (halves vs bf16).
        x = x.astype(jnp.int8)
        if B_pad != B:
            x = jnp.pad(x, ((0, B_pad - B), (0, 0)))
        return x

    # Stack both perspectives so a single BlockSpec streams them and the kernel
    # issues one fused matmul per tile.
    boards = jnp.stack([_prep_board(x_stm), _prep_board(x_nstm)], axis=0)  # (2, B_pad, 768) int8

    # Re-layout torch-convention params for the kernel (glue, not compute).
    w1_bf = jnp.transpose(w1).astype(jnp.bfloat16)     # (768, F) bf16 -> native MXU path
    b1_r = b1.reshape(1, F).astype(jnp.float32)        # (1, F)
    w2_stm = w2[:, :F].astype(jnp.float32)             # (1, F)
    w2_nstm = w2[:, F:].astype(jnp.float32)            # (1, F)
    b2_r = b2.reshape(1, 1).astype(jnp.float32)        # (1, 1)

    out = pl.pallas_call(
        perspective_kernel,
        out_shape=jax.ShapeDtypeStruct((B_pad, 1), jnp.float32),
        grid=(num_tiles,),
        in_specs=[
            # Streamed, double-buffered stacked board tiles.
            pl.BlockSpec((2, TB, INPUT_FEATURES), lambda i: (0, i, 0)),
            # Weights / biases: same block every step -> VMEM-resident.
            pl.BlockSpec((INPUT_FEATURES, F), lambda i: (0, 0)),
            pl.BlockSpec((1, F), lambda i: (0, 0)),
            pl.BlockSpec((1, F), lambda i: (0, 0)),
            pl.BlockSpec((1, F), lambda i: (0, 0)),
            pl.BlockSpec((1, 1), lambda i: (0, 0)),
        ],
        out_specs=pl.BlockSpec((TB, 1), lambda i: (i, 0)),
        compiler_params=pltpu.CompilerParams(
            dimension_semantics=("parallel",),
            vmem_limit_bytes=32 * 1024 * 1024,
        ),
    )(boards, w1_bf, b1_r, w2_stm, w2_nstm, b2_r)

    return out[:B]


def reference_forward(x_stm, x_nstm, w1, b1, w2, b2):
    """Pure-JAX f32 reference mirroring the PyTorch module exactly."""
    stm = x_stm @ w1.T + b1
    nstm = x_nstm @ w1.T + b1
    h = jnp.clip(jnp.concatenate([stm, nstm], axis=1), 0.0, 1.0)
    return jax.nn.sigmoid(h @ w2.T + b2)


def _make_inputs(key, B, F):
    k_stm, k_nstm, k_w1, k_b1, k_w2, k_b2 = jax.random.split(key, 6)
    # Dense 0/1 boards standing in for batch.{stm,nstm}_sparse.to_dense().
    x_stm = jax.random.bernoulli(k_stm, p=0.05,
                                 shape=(B, INPUT_FEATURES)).astype(jnp.float32)
    x_nstm = jax.random.bernoulli(k_nstm, p=0.05,
                                  shape=(B, INPUT_FEATURES)).astype(jnp.float32)
    # torch.nn.Linear-shaped params: (F, 768)/(F,) and (1, 2F)/(1,).
    bound1 = 1.0 / jnp.sqrt(jnp.float32(INPUT_FEATURES))
    bound2 = 1.0 / jnp.sqrt(jnp.float32(2 * F))
    w1 = jax.random.uniform(k_w1, (F, INPUT_FEATURES), jnp.float32, -bound1, bound1)
    b1 = jax.random.uniform(k_b1, (F,), jnp.float32, -bound1, bound1)
    w2 = jax.random.uniform(k_w2, (1, 2 * F), jnp.float32, -bound2, bound2)
    b2 = jax.random.uniform(k_b2, (1,), jnp.float32, -bound2, bound2)
    return x_stm, x_nstm, w1, b1, w2, b2


if __name__ == "__main__":
    F = 32                       # feature_output_size
    key = jax.random.PRNGKey(0)
    k_small, k_tiled, k_split = jax.random.split(key, 3)

    # Kernel uses bf16 w1 on the MXU -> no longer bit-identical to the f32
    # reference; tolerance loosened accordingly (per review).
    TOL = dict(atol=5e-3, rtol=5e-3)

    # 1) Small batch: single lane-aligned tile (B=8 padded to 128).
    B = 8
    xs, xn, w1, b1, w2, b2 = _make_inputs(k_small, B, F)
    out = jax.block_until_ready(perspective_forward(xs, xn, w1, b1, w2, b2))
    ref = reference_forward(xs, xn, w1, b1, w2, b2)
    assert out.shape == (B, 1)
    assert jnp.allclose(out, ref, **TOL)

    # 2) Multi-tile path with explicit small block: exercises batch tiling,
    #    padding, resident weights and per-tile output columns.
    B = 200
    xs, xn, w1, b1, w2, b2 = _make_inputs(k_tiled, B, F)
    out = jax.block_until_ready(
        perspective_forward(xs, xn, w1, b1, w2, b2, block_batch=128))
    ref = reference_forward(xs, xn, w1, b1, w2, b2)
    assert out.shape == (B, 1)
    assert jnp.allclose(out, ref, **TOL)

    # 3) Mid-size batch with default block_batch: exercises the >=2-tile split
    #    (megacore sharding path on v7x).
    B = 512
    xs, xn, w1, b1, w2, b2 = _make_inputs(k_split, B, F)
    out = jax.block_until_ready(perspective_forward(xs, xn, w1, b1, w2, b2))
    ref = reference_forward(xs, xn, w1, b1, w2, b2)
    assert out.shape == (B, 1)
    assert jnp.allclose(out, ref, **TOL)

    print("KERNEL_OK")
</pallas_src>

<mosaic_0001>
module attributes {stable_mosaic.version = 11 : i64} {
  func.func @perspective_kernel(%arg0: i32, %arg1: memref<2x128x768xi8, #tpu.memory_space<vmem>>, %arg2: memref<768x32xbf16, #tpu.memory_space<vmem>>, %arg3: memref<1x32xf32, #tpu.memory_space<vmem>>, %arg4: memref<1x32xf32, #tpu.memory_space<vmem>>, %arg5: memref<1x32xf32, #tpu.memory_space<vmem>>, %arg6: memref<1x1xf32, #tpu.memory_space<vmem>>, %arg7: memref<128x1xf32, #tpu.memory_space<vmem>>) attributes {dimension_semantics = [#tpu.dimension_semantics<parallel>], iteration_bounds = array<i64: 1>, scalar_prefetch = 0 : i64, scratch_operands = 0 : i64, tpu.core_type = #tpu.core_type<tc>, window_params = [{transform_indices = @transform_0, window_bounds = array<i64: 2, 128, 768>}, {pipeline_mode = #tpu.pipeline_mode<synchronous>, transform_indices = @transform_1, window_bounds = array<i64: 768, 32>}, {pipeline_mode = #tpu.pipeline_mode<synchronous>, transform_indices = @transform_2, window_bounds = array<i64: 1, 32>}, {pipeline_mode = #tpu.pipeline_mode<synchronous>, transform_indices = @transform_3, window_bounds = array<i64: 1, 32>}, {pipeline_mode = #tpu.pipeline_mode<synchronous>, transform_indices = @transform_4, window_bounds = array<i64: 1, 32>}, {pipeline_mode = #tpu.pipeline_mode<synchronous>, transform_indices = @transform_5, window_bounds = array<i64: 1, 1>}, {transform_indices = @transform_6, window_bounds = array<i64: 128, 1>}]} {
    %c0 = arith.constant 0 : index
    %c0_0 = arith.constant 0 : index
    %c0_1 = arith.constant 0 : index
    %0 = vector.load %arg1[%c0, %c0_0, %c0_1] : memref<2x128x768xi8, #tpu.memory_space<vmem>>, vector<2x128x768xi8>
    %1 = arith.sitofp %0 : vector<2x128x768xi8> to vector<2x128x768xbf16>
    %2 = vector.shape_cast %1 : vector<2x128x768xbf16> to vector<256x768xbf16>
    %c0_2 = arith.constant 0 : index
    %c0_3 = arith.constant 0 : index
    %3 = vector.load %arg2[%c0_2, %c0_3] : memref<768x32xbf16, #tpu.memory_space<vmem>>, vector<768x32xbf16>
    %cst = arith.constant dense<0.000000e+00> : vector<256x32xf32>
    %4 = tpu.matmul %2, %3, %cst {dimension_numbers = #tpu.dot_dimension_numbers<[1], [0], [0], [1], [0, 0, 1, 1], [], []>} : vector<256x768xbf16>, vector<768x32xbf16>, vector<256x32xf32> -> vector<256x32xf32>
    %c0_4 = arith.constant 0 : index
    %c0_5 = arith.constant 0 : index
    %5 = vector.load %arg3[%c0_4, %c0_5] : memref<1x32xf32, #tpu.memory_space<vmem>>, vector<1x32xf32>
    %6 = vector.broadcast %5 : vector<1x32xf32> to vector<256x32xf32>
    %7 = arith.addf %4, %6 : vector<256x32xf32>
    %cst_6 = arith.constant 0.000000e+00 : f32
    %cst_7 = arith.constant 1.000000e+00 : f32
    %8 = vector.broadcast %cst_6 : f32 to vector<256x32xf32>
    %9 = arith.maximumf %8, %7 : vector<256x32xf32>
    %10 = vector.broadcast %cst_7 : f32 to vector<256x32xf32>
    %11 = arith.minimumf %10, %9 : vector<256x32xf32>
    %12 = vector.extract_strided_slice %11 {offsets = [0, 0], sizes = [128, 32], strides = [1, 1]} : vector<256x32xf32> to vector<128x32xf32>
    %13 = vector.extract_strided_slice %11 {offsets = [128, 0], sizes = [128, 32], strides = [1, 1]} : vector<256x32xf32> to vector<128x32xf32>
    %c0_8 = arith.constant 0 : index
    %c0_9 = arith.constant 0 : index
    %14 = vector.load %arg4[%c0_8, %c0_9] : memref<1x32xf32, #tpu.memory_space<vmem>>, vector<1x32xf32>
    %15 = vector.broadcast %14 : vector<1x32xf32> to vector<128x32xf32>
    %16 = arith.mulf %12, %15 : vector<128x32xf32>
    %c0_10 = arith.constant 0 : index
    %c0_11 = arith.constant 0 : index
    %17 = vector.load %arg5[%c0_10, %c0_11] : memref<1x32xf32, #tpu.memory_space<vmem>>, vector<1x32xf32>
    %18 = vector.broadcast %17 : vector<1x32xf32> to vector<128x32xf32>
    %19 = arith.mulf %13, %18 : vector<128x32xf32>
    %20 = arith.addf %16, %19 : vector<128x32xf32>
    %cst_12 = arith.constant dense<0.000000e+00> : vector<128xf32>
    %21 = vector.multi_reduction <add>, %20, %cst_12 [1] : vector<128x32xf32> to vector<128xf32>
    %22 = vector.shape_cast %21 : vector<128xf32> to vector<128x1xf32>
    %c0_13 = arith.constant 0 : index
    %c0_14 = arith.constant 0 : index
    %23 = vector.load %arg6[%c0_13, %c0_14] : memref<1x1xf32, #tpu.memory_space<vmem>>, vector<1x1xf32>
    %24 = vector.broadcast %23 : vector<1x1xf32> to vector<128x1xf32>
    %25 = arith.addf %22, %24 : vector<128x1xf32>
    %26 = arith.negf %25 : vector<128x1xf32>
    %27 = math.exp %26 : vector<128x1xf32>
    %cst_15 = arith.constant 1.000000e+00 : f32
    %28 = vector.broadcast %cst_15 : f32 to vector<128x1xf32>
    %29 = arith.addf %28, %27 : vector<128x1xf32>
    %30 = arith.divf %28, %29 : vector<128x1xf32>
    %c0_16 = arith.constant 0 : index
    %c0_17 = arith.constant 0 : index
    %31 = vector.load %arg7[%c0_16, %c0_17] : memref<128x1xf32, #tpu.memory_space<vmem>>, vector<128x1xf32>
    tpu.vector_store %arg7[%c0_16, %c0_17], %30 {strides = array<i32>} : memref<128x1xf32, #tpu.memory_space<vmem>>, vector<128x1xf32>,
    return
  }
  func.func @transform_0(%arg0: i32) -> (i32, i32, i32) {
    %c0_i32 = arith.constant 0 : i32
    %c0_i32_0 = arith.constant 0 : i32
    %c0_i32_1 = arith.constant 0 : i32
    return %c0_i32, %arg0, %c0_i32_0 : i32, i32, i32
  }
  func.func @transform_1(%arg0: i32) -> (i32, i32) {
    %c0_i32 = arith.constant 0 : i32
    %c0_i32_0 = arith.constant 0 : i32
    %c0_i32_1 = arith.constant 0 : i32
    return %c0_i32, %c0_i32_0 : i32, i32
  }
  func.func @transform_2(%arg0: i32) -> (i32, i32) {
    %c0_i32 = arith.constant 0 : i32
    %c0_i32_0 = arith.constant 0 : i32
    %c0_i32_1 = arith.constant 0 : i32
    return %c0_i32, %c0_i32_0 : i32, i32
  }
  func.func @transform_3(%arg0: i32) -> (i32, i32) {
    %c0_i32 = arith.constant 0 : i32
    %c0_i32_0 = arith.constant 0 : i32
    %c0_i32_1 = arith.constant 0 : i32
    return %c0_i32, %c0_i32_0 : i32, i32
  }
  func.func @transform_4(%arg0: i32) -> (i32, i32) {
    %c0_i32 = arith.constant 0 : i32
    %c0_i32_0 = arith.constant 0 : i32
    %c0_i32_1 = arith.constant 0 : i32
    return %c0_i32, %c0_i32_0 : i32, i32
  }
  func.func @transform_5(%arg0: i32) -> (i32, i32) {
    %c0_i32 = arith.constant 0 : i32
    %c0_i32_0 = arith.constant 0 : i32
    %c0_i32_1 = arith.constant 0 : i32
    return %c0_i32, %c0_i32_0 : i32, i32
  }
  func.func @transform_6(%arg0: i32) -> (i32, i32) {
    %c0_i32 = arith.constant 0 : i32
    %c0_i32_0 = arith.constant 0 : i32
    return %arg0, %c0_i32 : i32, i32
  }
}

</mosaic_0001>

<llo_original>
// kernel: tpu_custom_call.1
$region0: #{tpu_custom_call.1}
  #allocation0 [shape = 'u32[]', space=smem, size = 0x4, offset = 0x4, fixed_abs, tag = 'smem constant byte address 0x4 - core index']
  #allocation1 [shape = 'u32[144,128]{1,0:T(1,128)}', space=vmem, size = 0x12000, scoped, tag = 'internal scratch']
  #allocation2 [shape = 'f32[1,1]{1,0:T(1,128)S(1)}', space=vmem, size = 0x200, scoped, tag = 'scoped memory for tpu_custom_call.1']
  %s0 = inlined_call_operand.vmem [shape: s8[2,128,768], index: 0, kind: input, shape index: {}]
  %s1 = inlined_call_operand.vmem [shape: bf16[768,32], index: 1, kind: input, shape index: {}]
  %s2 = inlined_call_operand.vmem [shape: f32[1,32], index: 2, kind: input, shape index: {}]
  %s3 = inlined_call_operand.vmem [shape: f32[1,32], index: 3, kind: input, shape index: {}]
  %s4 = inlined_call_operand.vmem [shape: f32[1,32], index: 4, kind: input, shape index: {}]
  %s5 = inlined_call_operand.<no memory space> [shape: f32[1,1], index: 5, kind: input, shape index: {}]
  %s6 = inlined_call_operand.vmem [shape: f32[128,1], index: 6, kind: output, shape index: {}]
  %s7 = sld [smem:[#allocation0]]
  $region34: #{tpu_custom_call.1} parent=0
    _
  %s9 = ssub.s32 1, %s7
  %s10 = scalar_select 0, %s9, %s7
  %v11 = vstv %s5
  %12 = vst [vmem:[#allocation2] sm:$0x1] %v11
  // Predicated region
  $region2: #{tpu_custom_call.1} parent=0 // pred_check
    _
  $region3: #{tpu_custom_call.1} parent=0 // pred_check_branch
    %14 = sbr.rel (0) target = $region5
  $region4: #{tpu_custom_call.1} parent=0 // pred_region
    _
  $region5: #{tpu_custom_call.1} parent=0 // pred_fallthru
    _
  // Predicated region
  $region6: #{tpu_custom_call.1} parent=0 // pred_check
    _
  $region7: #{tpu_custom_call.1} parent=0 // pred_check_branch
    %16 = sbr.rel (0) target = $region9
  $region8: #{tpu_custom_call.1} parent=0 // pred_region
    _
  $region9: #{tpu_custom_call.1} parent=0 // pred_fallthru
    _
  // Predicated region
  $region10: #{tpu_custom_call.1} parent=0 // pred_check
    _
  $region11: #{tpu_custom_call.1} parent=0 // pred_check_branch
    %18 = sbr.rel (0) target = $region13
  $region12: #{tpu_custom_call.1} parent=0 // pred_region
    _
  $region13: #{tpu_custom_call.1} parent=0 // pred_fallthru
    _
  // Predicated region
  $region14: #{tpu_custom_call.1} parent=0 // pred_check
    _
  $region15: #{tpu_custom_call.1} parent=0 // pred_check_branch
    %20 = sbr.rel (0) target = $region17
  $region16: #{tpu_custom_call.1} parent=0 // pred_region
    _
  $region17: #{tpu_custom_call.1} parent=0 // pred_fallthru
    _
  // Predicated region
  $region18: #{tpu_custom_call.1} parent=0 // pred_check
    _
  $region19: #{tpu_custom_call.1} parent=0 // pred_check_branch
    %22 = sbr.rel (0) target = $region21
  $region20: #{tpu_custom_call.1} parent=0 // pred_region
    _
  $region21: #{tpu_custom_call.1} parent=0 // pred_fallthru
    _
  // Predicated region
  $region22: #{tpu_custom_call.1} parent=0 // pred_check
    _
  $region23: #{tpu_custom_call.1} parent=0 // pred_check_branch
    %24 = sbr.rel (0) target = $region25
  $region24: #{tpu_custom_call.1} parent=0 // pred_region
    _
  $region25: #{tpu_custom_call.1} parent=0 // pred_fallthru
    _
  %v26 = vld [vmem:[%s0] sm:$0xff]
  %v27 = vld [vmem:[%s0 + $0x8] sm:$0xff]
  %v28 = vld [vmem:[%s0 + $0x10] sm:$0xff]
  %v29 = vld [vmem:[%s0 + $0x18] sm:$0xff]
  %v30 = vld [vmem:[%s0 + $0x20] sm:$0xff]
  %v31 = vld [vmem:[%s0 + $0x28] sm:$0xff]
  %v32 = vld [vmem:[%s0 + $0x30] sm:$0xff]
  %v33 = vld [vmem:[%s0 + $0x38] sm:$0xff]
  %v34 = vld [vmem:[%s0 + $0x40] sm:$0xff]
  %v35 = vld [vmem:[%s0 + $0x48] sm:$0xff]
  %v36 = vld [vmem:[%s0 + $0x50] sm:$0xff]
  %v37 = vld [vmem:[%s0 + $0x58] sm:$0xff]
  %v38 = vld [vmem:[%s0 + $0x60] sm:$0xff]
  %v39 = vld [vmem:[%s0 + $0x68] sm:$0xff]
  %v40 = vld [vmem:[%s0 + $0x70] sm:$0xff]
  %v41 = vld [vmem:[%s0 + $0x78] sm:$0xff]
  %v42 = vld [vmem:[%s0 + $0x80] sm:$0xff]
  %v43 = vld [vmem:[%s0 + $0x88] sm:$0xff]
  %v44 = vld [vmem:[%s0 + $0x90] sm:$0xff]
  %v45 = vld [vmem:[%s0 + $0x98] sm:$0xff]
  %v46 = vld [vmem:[%s0 + $0xa0] sm:$0xff]
  %v47 = vld [vmem:[%s0 + $0xa8] sm:$0xff]
  %v48 = vld [vmem:[%s0 + $0xb0] sm:$0xff]
  %v49 = vld [vmem:[%s0 + $0xb8] sm:$0xff]
  %v50 = vld [vmem:[%s0 + $0xc0] sm:$0xff]
  %v51 = vld [vmem:[%s0 + $0xc8] sm:$0xff]
  %v52 = vld [vmem:[%s0 + $0xd0] sm:$0xff]
  %v53 = vld [vmem:[%s0 + $0xd8] sm:$0xff]
  %v54 = vld [vmem:[%s0 + $0xe0] sm:$0xff]
  %v55 = vld [vmem:[%s0 + $0xe8] sm:$0xff]
  %v56 = vld [vmem:[%s0 + $0xf0] sm:$0xff]
  %v57 = vld [vmem:[%s0 + $0xf8] sm:$0xff]
  %v58 = vld [vmem:[%s0 + $0x100] sm:$0xff]
  %v59 = vld [vmem:[%s0 + $0x108] sm:$0xff]
  %v60 = vld [vmem:[%s0 + $0x110] sm:$0xff]
  %v61 = vld [vmem:[%s0 + $0x118] sm:$0xff]
  %v62 = vld [vmem:[%s0 + $0x120] sm:$0xff]
  %v63 = vld [vmem:[%s0 + $0x128] sm:$0xff]
  %v64 = vld [vmem:[%s0 + $0x130] sm:$0xff]
  %v65 = vld [vmem:[%s0 + $0x138] sm:$0xff]
  %v66 = vld [vmem:[%s0 + $0x140] sm:$0xff]
  %v67 = vld [vmem:[%s0 + $0x148] sm:$0xff]
  %v68 = vld [vmem:[%s0 + $0x150] sm:$0xff]
  %v69 = vld [vmem:[%s0 + $0x158] sm:$0xff]
  %v70 = vld [vmem:[%s0 + $0x160] sm:$0xff]
  %v71 = vld [vmem:[%s0 + $0x168] sm:$0xff]
  %v72 = vld [vmem:[%s0 + $0x170] sm:$0xff]
  %v73 = vld [vmem:[%s0 + $0x178] sm:$0xff]
  %v74 = vunpack.c.l.s8.bf16 %v26
  %v75 = vunpack.c.l.s8.bf16 %v27
  %v76 = vunpack.c.l.s8.bf16 %v28
  %v77 = vunpack.c.l.s8.bf16 %v29
  %v78 = vunpack.c.l.s8.bf16 %v30
  %v79 = vunpack.c.l.s8.bf16 %v31
  %v80 = vunpack.c.h.s8.bf16 %v26
  %v81 = vunpack.c.h.s8.bf16 %v27
  %v82 = vunpack.c.h.s8.bf16 %v28
  %v83 = vunpack.c.h.s8.bf16 %v29
  %v84 = vunpack.c.h.s8.bf16 %v30
  %v85 = vunpack.c.h.s8.bf16 %v31
  %v86 = vunpack.c.l.s8.bf16 %v32
  %v87 = vunpack.c.l.s8.bf16 %v33
  %v88 = vunpack.c.l.s8.bf16 %v34
  %v89 = vunpack.c.l.s8.bf16 %v35
  %v90 = vunpack.c.l.s8.bf16 %v36
  %v91 = vunpack.c.l.s8.bf16 %v37
  %v92 = vunpack.c.h.s8.bf16 %v32
  %v93 = vunpack.c.h.s8.bf16 %v33
  %v94 = vunpack.c.h.s8.bf16 %v34
  %v95 = vunpack.c.h.s8.bf16 %v35
  %v96 = vunpack.c.h.s8.bf16 %v36
  %v97 = vunpack.c.h.s8.bf16 %v37
  %v98 = vunpack.c.l.s8.bf16 %v38
  %v99 = vunpack.c.l.s8.bf16 %v39
  %v100 = vunpack.c.l.s8.bf16 %v40
  %v101 = vunpack.c.l.s8.bf16 %v41
  %v102 = vunpack.c.l.s8.bf16 %v42
  %v103 = vunpack.c.l.s8.bf16 %v43
  %v104 = vunpack.c.h.s8.bf16 %v38
  %v105 = vunpack.c.h.s8.bf16 %v39
  %v106 = vunpack.c.h.s8.bf16 %v40
  %v107 = vunpack.c.h.s8.bf16 %v41
  %v108 = vunpack.c.h.s8.bf16 %v42
  %v109 = vunpack.c.h.s8.bf16 %v43
  %v110 = vunpack.c.l.s8.bf16 %v44
  %v111 = vunpack.c.l.s8.bf16 %v45
  %v112 = vunpack.c.l.s8.bf16 %v46
  %v113 = vunpack.c.l.s8.bf16 %v47
  %v114 = vunpack.c.l.s8.bf16 %v48
  %v115 = vunpack.c.l.s8.bf16 %v49
  %v116 = vunpack.c.h.s8.bf16 %v44
  %v117 = vunpack.c.h.s8.bf16 %v45
  %v118 = vunpack.c.h.s8.bf16 %v46
  %v119 = vunpack.c.h.s8.bf16 %v47
  %v120 = vunpack.c.h.s8.bf16 %v48
  %v121 = vunpack.c.h.s8.bf16 %v49
  %v122 = vunpack.c.l.s8.bf16 %v50
  %v123 = vunpack.c.l.s8.bf16 %v51
  %v124 = vunpack.c.l.s8.bf16 %v52
  %v125 = vunpack.c.l.s8.bf16 %v53
  %v126 = vunpack.c.l.s8.bf16 %v54
  %v127 = vunpack.c.l.s8.bf16 %v55
  %v128 = vunpack.c.h.s8.bf16 %v50
  %v129 = vunpack.c.h.s8.bf16 %v51
  %v130 = vunpack.c.h.s8.bf16 %v52
  %v131 = vunpack.c.h.s8.bf16 %v53
  %v132 = vunpack.c.h.s8.bf16 %v54
  %v133 = vunpack.c.h.s8.bf16 %v55
  %v134 = vunpack.c.l.s8.bf16 %v56
  %v135 = vunpack.c.l.s8.bf16 %v57
  %v136 = vunpack.c.l.s8.bf16 %v58
  %v137 = vunpack.c.l.s8.bf16 %v59
  %v138 = vunpack.c.l.s8.bf16 %v60
  %v139 = vunpack.c.l.s8.bf16 %v61
  %v140 = vunpack.c.h.s8.bf16 %v56
  %v141 = vunpack.c.h.s8.bf16 %v57
  %v142 = vunpack.c.h.s8.bf16 %v58
  %v143 = vunpack.c.h.s8.bf16 %v59
  %v144 = vunpack.c.h.s8.bf16 %v60
  %v145 = vunpack.c.h.s8.bf16 %v61
  %v146 = vunpack.c.l.s8.bf16 %v62
  %v147 = vunpack.c.l.s8.bf16 %v63
  %v148 = vunpack.c.l.s8.bf16 %v64
  %v149 = vunpack.c.l.s8.bf16 %v65
  %v150 = vunpack.c.l.s8.bf16 %v66
  %v151 = vunpack.c.l.s8.bf16 %v67
  %v152 = vunpack.c.h.s8.bf16 %v62
  %v153 = vunpack.c.h.s8.bf16 %v63
  %v154 = vunpack.c.h.s8.bf16 %v64
  %v155 = vunpack.c.h.s8.bf16 %v65
  %v156 = vunpack.c.h.s8.bf16 %v66
  %v157 = vunpack.c.h.s8.bf16 %v67
  %v158 = vunpack.c.l.s8.bf16 %v68
  %v159 = vunpack.c.l.s8.bf16 %v69
  %v160 = vunpack.c.l.s8.bf16 %v70
  %v161 = vunpack.c.l.s8.bf16 %v71
  %v162 = vunpack.c.l.s8.bf16 %v72
  %v163 = vunpack.c.l.s8.bf16 %v73
  %v164 = vunpack.c.h.s8.bf16 %v68
  %v165 = vunpack.c.h.s8.bf16 %v69
  %v166 = vunpack.c.h.s8.bf16 %v70
  %v167 = vunpack.c.h.s8.bf16 %v71
  %v168 = vunpack.c.h.s8.bf16 %v72
  %v169 = vunpack.c.h.s8.bf16 %v73
  %v170 = vld [vmem:[%s1] sm:$0xf]
  %v171 = vld [vmem:[%s1 + $0x4] sm:$0xf]
  %v172 = vld [vmem:[%s1 + $0x8] sm:$0xf]
  %v173 = vld [vmem:[%s1 + $0xc] sm:$0xf]
  %v174 = vld [vmem:[%s1 + $0x10] sm:$0xf]
  %v175 = vld [vmem:[%s1 + $0x14] sm:$0xf]
  %v176 = vld [vmem:[%s1 + $0x18] sm:$0xf]
  %v177 = vld [vmem:[%s1 + $0x1c] sm:$0xf]
  %v178 = vld [vmem:[%s1 + $0x20] sm:$0xf]
  %v179 = vld [vmem:[%s1 + $0x24] sm:$0xf]
  %v180 = vld [vmem:[%s1 + $0x28] sm:$0xf]
  %v181 = vld [vmem:[%s1 + $0x2c] sm:$0xf]
  %v182 = vld [vmem:[%s1 + $0x30] sm:$0xf]
  %v183 = vld [vmem:[%s1 + $0x34] sm:$0xf]
  %v184 = vld [vmem:[%s1 + $0x38] sm:$0xf]
  %v185 = vld [vmem:[%s1 + $0x3c] sm:$0xf]
  %v186 = vld [vmem:[%s1 + $0x40] sm:$0xf]
  %v187 = vld [vmem:[%s1 + $0x44] sm:$0xf]
  %v188 = vld [vmem:[%s1 + $0x48] sm:$0xf]
  %v189 = vld [vmem:[%s1 + $0x4c] sm:$0xf]
  %v190 = vld [vmem:[%s1 + $0x50] sm:$0xf]
  %v191 = vld [vmem:[%s1 + $0x54] sm:$0xf]
  %v192 = vld [vmem:[%s1 + $0x58] sm:$0xf]
  %v193 = vld [vmem:[%s1 + $0x5c] sm:$0xf]
  %v194 = vld [vmem:[%s1 + $0x60] sm:$0xf]
  %v195 = vld [vmem:[%s1 + $0x64] sm:$0xf]
  %v196 = vld [vmem:[%s1 + $0x68] sm:$0xf]
  %v197 = vld [vmem:[%s1 + $0x6c] sm:$0xf]
  %v198 = vld [vmem:[%s1 + $0x70] sm:$0xf]
  %v199 = vld [vmem:[%s1 + $0x74] sm:$0xf]
  %v200 = vld [vmem:[%s1 + $0x78] sm:$0xf]
  %v201 = vld [vmem:[%s1 + $0x7c] sm:$0xf]
  %v202 = vld [vmem:[%s1 + $0x80] sm:$0xf]
  %v203 = vld [vmem:[%s1 + $0x84] sm:$0xf]
  %v204 = vld [vmem:[%s1 + $0x88] sm:$0xf]
  %v205 = vld [vmem:[%s1 + $0x8c] sm:$0xf]
  %v206 = vld [vmem:[%s1 + $0x90] sm:$0xf]
  %v207 = vld [vmem:[%s1 + $0x94] sm:$0xf]
  %v208 = vld [vmem:[%s1 + $0x98] sm:$0xf]
  %v209 = vld [vmem:[%s1 + $0x9c] sm:$0xf]
  %v210 = vld [vmem:[%s1 + $0xa0] sm:$0xf]
  %v211 = vld [vmem:[%s1 + $0xa4] sm:$0xf]
  %v212 = vld [vmem:[%s1 + $0xa8] sm:$0xf]
  %v213 = vld [vmem:[%s1 + $0xac] sm:$0xf]
  %v214 = vld [vmem:[%s1 + $0xb0] sm:$0xf]
  %v215 = vld [vmem:[%s1 + $0xb4] sm:$0xf]
  %v216 = vld [vmem:[%s1 + $0xb8] sm:$0xf]
  %v217 = vld [vmem:[%s1 + $0xbc] sm:$0xf]
  %v218 = vld [vmem:[%s1 + $0xc0] sm:$0xf]
  %v219 = vld [vmem:[%s1 + $0xc4] sm:$0xf]
  %v220 = vld [vmem:[%s1 + $0xc8] sm:$0xf]
  %v221 = vld [vmem:[%s1 + $0xcc] sm:$0xf]
  %v222 = vld [vmem:[%s1 + $0xd0] sm:$0xf]
  %v223 = vld [vmem:[%s1 + $0xd4] sm:$0xf]
  %v224 = vld [vmem:[%s1 + $0xd8] sm:$0xf]
  %v225 = vld [vmem:[%s1 + $0xdc] sm:$0xf]
  %v226 = vld [vmem:[%s1 + $0xe0] sm:$0xf]
  %v227 = vld [vmem:[%s1 + $0xe4] sm:$0xf]
  %v228 = vld [vmem:[%s1 + $0xe8] sm:$0xf]
  %v229 = vld [vmem:[%s1 + $0xec] sm:$0xf]
  %v230 = vld [vmem:[%s1 + $0xf0] sm:$0xf]
  %v231 = vld [vmem:[%s1 + $0xf4] sm:$0xf]
  %v232 = vld [vmem:[%s1 + $0xf8] sm:$0xf]
  %v233 = vld [vmem:[%s1 + $0xfc] sm:$0xf]
  %v234 = vld [vmem:[%s1 + $0x100] sm:$0xf]
  %v235 = vld [vmem:[%s1 + $0x104] sm:$0xf]
  %v236 = vld [vmem:[%s1 + $0x108] sm:$0xf]
  %v237 = vld [vmem:[%s1 + $0x10c] sm:$0xf]
  %v238 = vld [vmem:[%s1 + $0x110] sm:$0xf]
  %v239 = vld [vmem:[%s1 + $0x114] sm:$0xf]
  %v240 = vld [vmem:[%s1 + $0x118] sm:$0xf]
  %v241 = vld [vmem:[%s1 + $0x11c] sm:$0xf]
  %v242 = vld [vmem:[%s1 + $0x120] sm:$0xf]
  %v243 = vld [vmem:[%s1 + $0x124] sm:$0xf]
  %v244 = vld [vmem:[%s1 + $0x128] sm:$0xf]
  %v245 = vld [vmem:[%s1 + $0x12c] sm:$0xf]
  %v246 = vld [vmem:[%s1 + $0x130] sm:$0xf]
  %v247 = vld [vmem:[%s1 + $0x134] sm:$0xf]
  %v248 = vld [vmem:[%s1 + $0x138] sm:$0xf]
  %v249 = vld [vmem:[%s1 + $0x13c] sm:$0xf]
  %v250 = vld [vmem:[%s1 + $0x140] sm:$0xf]
  %v251 = vld [vmem:[%s1 + $0x144] sm:$0xf]
  %v252 = vld [vmem:[%s1 + $0x148] sm:$0xf]
  %v253 = vld [vmem:[%s1 + $0x14c] sm:$0xf]
  %v254 = vld [vmem:[%s1 + $0x150] sm:$0xf]
  %v255 = vld [vmem:[%s1 + $0x154] sm:$0xf]
  %v256 = vld [vmem:[%s1 + $0x158] sm:$0xf]
  %v257 = vld [vmem:[%s1 + $0x15c] sm:$0xf]
  %v258 = vld [vmem:[%s1 + $0x160] sm:$0xf]
  %v259 = vld [vmem:[%s1 + $0x164] sm:$0xf]
  %v260 = vld [vmem:[%s1 + $0x168] sm:$0xf]
  %v261 = vld [vmem:[%s1 + $0x16c] sm:$0xf]
  %v262 = vld [vmem:[%s1 + $0x170] sm:$0xf]
  %v263 = vld [vmem:[%s1 + $0x174] sm:$0xf]
  %v264 = vld [vmem:[%s1 + $0x178] sm:$0xf]
  %v265 = vld [vmem:[%s1 + $0x17c] sm:$0xf]
  %v266 = vld [vmem:[%s2] sm:$0x1]
  %v268 = vlaneseq
  %v269 = vshrl.u32 %v268, 7
  %v270 = vsub.s32 0, %v269
  %v271 = vrot.slane %v266, %v270
  %v369 = vunpack.c.l.b16 %v170
  %v370 = vunpack.c.l.b16 %v171
  %v371 = vunpack.c.l.b16 %v172
  %v372 = vunpack.c.l.b16 %v173
  %v373 = vunpack.c.l.b16 %v174
  %v374 = vunpack.c.l.b16 %v175
  %v375 = vunpack.c.l.b16 %v176
  %v376 = vunpack.c.l.b16 %v177
  %v377 = vunpack.c.l.b16 %v178
  %v378 = vunpack.c.l.b16 %v179
  %v379 = vunpack.c.l.b16 %v180
  %v380 = vunpack.c.l.b16 %v181
  %v381 = vunpack.c.l.b16 %v182
  %v382 = vunpack.c.l.b16 %v183
  %v383 = vunpack.c.l.b16 %v184
  %v384 = vunpack.c.l.b16 %v185
  %v385 = vunpack.c.l.b16 %v186
  %v386 = vunpack.c.l.b16 %v187
  %v387 = vunpack.c.l.b16 %v188
  %v388 = vunpack.c.l.b16 %v189
  %v389 = vunpack.c.l.b16 %v190
  %v390 = vunpack.c.l.b16 %v191
  %v391 = vunpack.c.l.b16 %v192
  %v392 = vunpack.c.l.b16 %v193
  %v393 = vunpack.c.l.b16 %v194
  %v394 = vunpack.c.l.b16 %v195
  %v395 = vunpack.c.l.b16 %v196
  %v396 = vunpack.c.l.b16 %v197
  %v397 = vunpack.c.l.b16 %v198
  %v398 = vunpack.c.l.b16 %v199
  %v399 = vunpack.c.l.b16 %v200
  %v400 = vunpack.c.l.b16 %v201
  %v401 = vunpack.c.l.b16 %v202
  %v402 = vunpack.c.l.b16 %v203
  %v403 = vunpack.c.l.b16 %v204
  %v404 = vunpack.c.l.b16 %v205
  %v405 = vunpack.c.l.b16 %v206
  %v406 = vunpack.c.l.b16 %v207
  %v407 = vunpack.c.l.b16 %v208
  %v408 = vunpack.c.l.b16 %v209
  %v409 = vunpack.c.l.b16 %v210
  %v410 = vunpack.c.l.b16 %v211
  %v411 = vunpack.c.l.b16 %v212
  %v412 = vunpack.c.l.b16 %v213
  %v413 = vunpack.c.l.b16 %v214
  %v414 = vunpack.c.l.b16 %v215
  %v415 = vunpack.c.l.b16 %v216
  %v416 = vunpack.c.l.b16 %v217
  %v417 = vunpack.c.l.b16 %v218
  %v418 = vunpack.c.l.b16 %v219
  %v419 = vunpack.c.l.b16 %v220
  %v420 = vunpack.c.l.b16 %v221
  %v421 = vunpack.c.l.b16 %v222
  %v422 = vunpack.c.l.b16 %v223
  %v423 = vunpack.c.l.b16 %v224
  %v424 = vunpack.c.l.b16 %v225
  %v425 = vunpack.c.l.b16 %v226
  %v426 = vunpack.c.l.b16 %v227
  %v427 = vunpack.c.l.b16 %v228
  %v428 = vunpack.c.l.b16 %v229
  %v429 = vunpack.c.l.b16 %v230
  %v430 = vunpack.c.l.b16 %v231
  %v431 = vunpack.c.l.b16 %v232
  %v432 = vunpack.c.l.b16 %v233
  %v433 = vunpack.c.l.b16 %v234
  %v434 = vunpack.c.l.b16 %v235
  %v435 = vunpack.c.l.b16 %v236
  %v436 = vunpack.c.l.b16 %v237
  %v437 = vunpack.c.l.b16 %v238
  %v438 = vunpack.c.l.b16 %v239
  %v439 = vunpack.c.l.b16 %v240
  %v440 = vunpack.c.l.b16 %v241
  %v441 = vunpack.c.l.b16 %v242
  %v442 = vunpack.c.l.b16 %v243
  %v443 = vunpack.c.l.b16 %v244
  %v444 = vunpack.c.l.b16 %v245
  %v445 = vunpack.c.l.b16 %v246
  %v446 = vunpack.c.l.b16 %v247
  %v447 = vunpack.c.l.b16 %v248
  %v448 = vunpack.c.l.b16 %v249
  %v449 = vunpack.c.l.b16 %v250
  %v450 = vunpack.c.l.b16 %v251
  %v451 = vunpack.c.l.b16 %v252
  %v452 = vunpack.c.l.b16 %v253
  %v453 = vunpack.c.l.b16 %v254
  %v454 = vunpack.c.l.b16 %v255
  %v455 = vunpack.c.l.b16 %v256
  %v456 = vunpack.c.l.b16 %v257
  %v457 = vunpack.c.l.b16 %v258
  %v458 = vunpack.c.l.b16 %v259
  %v459 = vunpack.c.l.b16 %v260
  %v460 = vunpack.c.l.b16 %v261
  %v461 = vunpack.c.l.b16 %v262
  %v462 = vunpack.c.l.b16 %v263
  %v463 = vunpack.c.l.b16 %v264
  %v464 = vunpack.c.l.b16 %v265
  %v465 = vpack.c.b16 %v370, %v369
  %v466 = vpack.c.b16 %v372, %v371
  %v467 = vpack.c.b16 %v374, %v373
  %v468 = vpack.c.b16 %v376, %v375
  %v469 = vpack.c.b16 %v378, %v377
  %v470 = vpack.c.b16 %v380, %v379
  %v471 = vpack.c.b16 %v382, %v381
  %v472 = vpack.c.b16 %v384, %v383
  %v473 = vpack.c.b16 %v386, %v385
  %v474 = vpack.c.b16 %v388, %v387
  %v475 = vpack.c.b16 %v390, %v389
  %v476 = vpack.c.b16 %v392, %v391
  %v477 = vpack.c.b16 %v394, %v393
  %v478 = vpack.c.b16 %v396, %v395
  %v479 = vpack.c.b16 %v398, %v397
  %v480 = vpack.c.b16 %v400, %v399
  %v481 = vpack.c.b16 %v402, %v401
  %v482 = vpack.c.b16 %v404, %v403
  %v483 = vpack.c.b16 %v406, %v405
  %v484 = vpack.c.b16 %v408, %v407
  %v485 = vpack.c.b16 %v410, %v409
  %v486 = vpack.c.b16 %v412, %v411
  %v487 = vpack.c.b16 %v414, %v413
  %v488 = vpack.c.b16 %v416, %v415
  %v489 = vpack.c.b16 %v418, %v417
  %v490 = vpack.c.b16 %v420, %v419
  %v491 = vpack.c.b16 %v422, %v421
  %v492 = vpack.c.b16 %v424, %v423
  %v493 = vpack.c.b16 %v426, %v425
  %v494 = vpack.c.b16 %v428, %v427
  %v495 = vpack.c.b16 %v430, %v429
  %v496 = vpack.c.b16 %v432, %v431
  %v497 = vpack.c.b16 %v434, %v433
  %v498 = vpack.c.b16 %v436, %v435
  %v499 = vpack.c.b16 %v438, %v437
  %v500 = vpack.c.b16 %v440, %v439
  %v501 = vpack.c.b16 %v442, %v441
  %v502 = vpack.c.b16 %v444, %v443
  %v503 = vpack.c.b16 %v446, %v445
  %v504 = vpack.c.b16 %v448, %v447
  %v505 = vpack.c.b16 %v450, %v449
  %v506 = vpack.c.b16 %v452, %v451
  %v507 = vpack.c.b16 %v454, %v453
  %v508 = vpack.c.b16 %v456, %v455
  %v509 = vpack.c.b16 %v458, %v457
  %v510 = vpack.c.b16 %v460, %v459
  %v511 = vpack.c.b16 %v462, %v461
  %v512 = vpack.c.b16 %v464, %v463
  %561 = vmatprep.subr.bf16.mxu0 0
  %562 = vmatpush1.bf16.msra.mxu0 %v465
  %563 = vmatprep.subr.bf16.mxu0 0
  %564 = vmatpush1.bf16.msra.mxu0 %v466
  %565 = vmatprep.subr.bf16.mxu0 0
  %566 = vmatpush1.bf16.msra.mxu0 %v467
  %567 = vmatprep.subr.bf16.mxu0 0
  %568 = vmatpush1.bf16.msra.mxu0 %v468
  %569 = vmatprep.subr.bf16.mxu0 0
  %570 = vmatpush1.bf16.msra.mxu0 %v469
  %571 = vmatprep.subr.bf16.mxu0 0
  %572 = vmatpush1.bf16.msra.mxu0 %v470
  %573 = vmatprep.subr.bf16.mxu0 0
  %574 = vmatpush1.bf16.msra.mxu0 %v471
  %575 = vmatprep.subr.bf16.mxu0 0
  %576 = vmatpush1.bf16.msra.mxu0 %v472
  %577 = vmatprep.subr.bf16.mxu0 0
  %578 = vmatpush1.bf16.msra.mxu0 %v473
  %579 = vmatprep.subr.bf16.mxu0 0
  %580 = vmatpush1.bf16.msra.mxu0 %v474
  %581 = vmatprep.subr.bf16.mxu0 0
  %582 = vmatpush1.bf16.msra.mxu0 %v475
  %583 = vmatprep.subr.bf16.mxu0 0
  %584 = vmatpush1.bf16.msra.mxu0 %v476
  %585 = vmatprep.subr.bf16.mxu0 0
  %586 = vmatpush1.bf16.msra.mxu0 %v477
  %587 = vmatprep.subr.bf16.mxu0 0
  %588 = vmatpush1.bf16.msra.mxu0 %v478
  %589 = vmatprep.subr.bf16.mxu0 0
  %590 = vmatpush1.bf16.msra.mxu0 %v479
  %591 = vmatprep.subr.bf16.mxu0 0
  %592 = vmatpush1.bf16.msra.mxu0 %v480
  %593 = vmatprep.mubr.bf16.mxu0 %v75
  %594 = vmatmul.mubr.bf16.gmra.mrb[0].mxu0 %v74
  %v595 = vpop.f32.mrb[0].mxu0
  %v596 = vadd.f32 %v271, %v595
  %v597 = vpop.f32.mrb[0].mxu0
  %v598 = vpop.f32.mrb[0].mxu0
  %v599 = vadd.f32 %v271, %v598
  %v600 = vpop.f32.mrb[0].mxu0
  %601 = vmatprep.mubr.bf16.mxu0 %v81
  %602 = vmatmul.mubr.bf16.gmra.mrb[0].mxu0 %v80
  %v603 = vpop.f32.mrb[0].mxu0
  %v604 = vadd.f32 %v271, %v603
  %v605 = vpop.f32.mrb[0].mxu0
  %v606 = vpop.f32.mrb[0].mxu0
  %v607 = vadd.f32 %v271, %v606
  %v608 = vpop.f32.mrb[0].mxu0
  %609 = vmatprep.mubr.bf16.mxu0 %v87
  %610 = vmatmul.mubr.bf16.gmra.mrb[0].mxu0 %v86
  %v611 = vpop.f32.mrb[0].mxu0
  %v612 = vadd.f32 %v271, %v611
  %v613 = vpop.f32.mrb[0].mxu0
  %v614 = vpop.f32.mrb[0].mxu0
  %v615 = vadd.f32 %v271, %v614
  %v616 = vpop.f32.mrb[0].mxu0
  %617 = vmatprep.mubr.bf16.mxu0 %v93
  %618 = vmatmul.mubr.bf16.gmra.mrb[0].mxu0 %v92
  %v619 = vpop.f32.mrb[0].mxu0
  %v620 = vadd.f32 %v271, %v619
  %v621 = vpop.f32.mrb[0].mxu0
  %v622 = vpop.f32.mrb[0].mxu0
  %v623 = vadd.f32 %v271, %v622
  %v624 = vpop.f32.mrb[0].mxu0
  %625 = vmatprep.mubr.bf16.mxu0 %v99
  %626 = vmatmul.mubr.bf16.gmra.mrb[0].mxu0 %v98
  %v627 = vpop.f32.mrb[0].mxu0
  %v628 = vadd.f32 %v271, %v627
  %v629 = vpop.f32.mrb[0].mxu0
  %v630 = vpop.f32.mrb[0].mxu0
  %v631 = vadd.f32 %v271, %v630
  %v632 = vpop.f32.mrb[0].mxu0
  %633 = vmatprep.mubr.bf16.mxu0 %v105
  %634 = vmatmul.mubr.bf16.gmra.mrb[0].mxu0 %v104
  %v635 = vpop.f32.mrb[0].mxu0
  %v636 = vadd.f32 %v271, %v635
  %v637 = vpop.f32.mrb[0].mxu0
  %v638 = vpop.f32.mrb[0].mxu0
  %v639 = vadd.f32 %v271, %v638
  %v640 = vpop.f32.mrb[0].mxu0
  %641 = vmatprep.mubr.bf16.mxu0 %v111
  %642 = vmatmul.mubr.bf16.gmra.mrb[0].mxu0 %v110
  %v643 = vpop.f32.mrb[0].mxu0
  %v644 = vadd.f32 %v271, %v643
  %v645 = vpop.f32.mrb[0].mxu0
  %v646 = vpop.f32.mrb[0].mxu0
  %v647 = vadd.f32 %v271, %v646
  %v648 = vpop.f32.mrb[0].mxu0
  %649 = vmatprep.mubr.bf16.mxu0 %v117
  %650 = vmatmul.mubr.bf16.gmra.mrb[0].mxu0 %v116
  %v651 = vpop.f32.mrb[0].mxu0
  %v652 = vadd.f32 %v271, %v651
  %v653 = vpop.f32.mrb[0].mxu0
  %v654 = vpop.f32.mrb[0].mxu0
  %v655 = vadd.f32 %v271, %v654
  %v656 = vpop.f32.mrb[0].mxu0
  %657 = vmatprep.mubr.bf16.mxu0 %v123
  %658 = vmatmul.mubr.bf16.gmra.mrb[0].mxu0 %v122
  %v659 = vpop.f32.mrb[0].mxu0
  %v660 = vadd.f32 %v271, %v659
  %v661 = vpop.f32.mrb[0].mxu0
  %v662 = vpop.f32.mrb[0].mxu0
  %v663 = vadd.f32 %v271, %v662
  %v664 = vpop.f32.mrb[0].mxu0
  %665 = vmatprep.mubr.bf16.mxu0 %v129
  %666 = vmatmul.mubr.bf16.gmra.mrb[0].mxu0 %v128
  %v667 = vpop.f32.mrb[0].mxu0
  %v668 = vadd.f32 %v271, %v667
  %v669 = vpop.f32.mrb[0].mxu0
  %v670 = vpop.f32.mrb[0].mxu0
  %v671 = vadd.f32 %v271, %v670
  %v672 = vpop.f32.mrb[0].mxu0
  %673 = vmatprep.mubr.bf16.mxu0 %v135
  %674 = vmatmul.mubr.bf16.gmra.mrb[0].mxu0 %v134
  %v675 = vpop.f32.mrb[0].mxu0
  %v676 = vadd.f32 %v271, %v675
  %v677 = vpop.f32.mrb[0].mxu0
  %v678 = vpop.f32.mrb[0].mxu0
  %v679 = vadd.f32 %v271, %v678
  %v680 = vpop.f32.mrb[0].mxu0
  %681 = vmatprep.mubr.bf16.mxu0 %v141
  %682 = vmatmul.mubr.bf16.gmra.mrb[0].mxu0 %v140
  %v683 = vpop.f32.mrb[0].mxu0
  %v684 = vadd.f32 %v271, %v683
  %v685 = vpop.f32.mrb[0].mxu0
  %v686 = vpop.f32.mrb[0].mxu0
  %v687 = vadd.f32 %v271, %v686
  %v688 = vpop.f32.mrb[0].mxu0
  %689 = vmatprep.mubr.bf16.mxu0 %v147
  %690 = vmatmul.mubr.bf16.gmra.mrb[0].mxu0 %v146
  %v691 = vpop.f32.mrb[0].mxu0
  %v692 = vadd.f32 %v271, %v691
  %v693 = vpop.f32.mrb[0].mxu0
  %v694 = vpop.f32.mrb[0].mxu0
  %v695 = vadd.f32 %v271, %v694
  %v696 = vpop.f32.mrb[0].mxu0
  %697 = vmatprep.mubr.bf16.mxu0 %v153
  %698 = vmatmul.mubr.bf16.gmra.mrb[0].mxu0 %v152
  %v699 = vpop.f32.mrb[0].mxu0
  %v700 = vadd.f32 %v271, %v699
  %v701 = vpop.f32.mrb[0].mxu0
  %v702 = vpop.f32.mrb[0].mxu0
  %v703 = vadd.f32 %v271, %v702
  %v704 = vpop.f32.mrb[0].mxu0
  %705 = vmatprep.mubr.bf16.mxu0 %v159
  %706 = vmatmul.mubr.bf16.gmra.mrb[0].mxu0 %v158
  %v707 = vpop.f32.mrb[0].mxu0
  %v708 = vadd.f32 %v271, %v707
  %v709 = vpop.f32.mrb[0].mxu0
  %v710 = vpop.f32.mrb[0].mxu0
  %v711 = vadd.f32 %v271, %v710
  %v712 = vpop.f32.mrb[0].mxu0
  %713 = vmatprep.mubr.bf16.mxu0 %v165
  %714 = vmatmul.mubr.bf16.gmra.mrb[0].mxu0 %v164
  %v715 = vpop.f32.mrb[0].mxu0
  %v716 = vadd.f32 %v271, %v715
  %v717 = vpop.f32.mrb[0].mxu0
  %v718 = vpop.f32.mrb[0].mxu0
  %v719 = vadd.f32 %v271, %v718
  %v720 = vpop.f32.mrb[0].mxu0
  %721 = vdwg.mxu0
  %722 = vmatprep.subr.bf16.mxu0 0
  %723 = vmatpush1.bf16.msra.mxu0 %v481
  %724 = vmatprep.subr.bf16.mxu0 0
  %725 = vmatpush1.bf16.msra.mxu0 %v482
  %726 = vmatprep.subr.bf16.mxu0 0
  %727 = vmatpush1.bf16.msra.mxu0 %v483
  %728 = vmatprep.subr.bf16.mxu0 0
  %729 = vmatpush1.bf16.msra.mxu0 %v484
  %730 = vmatprep.subr.bf16.mxu0 0
  %731 = vmatpush1.bf16.msra.mxu0 %v485
  %732 = vmatprep.subr.bf16.mxu0 0
  %733 = vmatpush1.bf16.msra.mxu0 %v486
  %734 = vmatprep.subr.bf16.mxu0 0
  %735 = vmatpush1.bf16.msra.mxu0 %v487
  %736 = vmatprep.subr.bf16.mxu0 0
  %737 = vmatpush1.bf16.msra.mxu0 %v488
  %738 = vmatprep.subr.bf16.mxu0 0
  %739 = vmatpush1.bf16.msra.mxu0 %v489
  %740 = vmatprep.subr.bf16.mxu0 0
  %741 = vmatpush1.bf16.msra.mxu0 %v490
  %742 = vmatprep.subr.bf16.mxu0 0
  %743 = vmatpush1.bf16.msra.mxu0 %v491
  %744 = vmatprep.subr.bf16.mxu0 0
  %745 = vmatpush1.bf16.msra.mxu0 %v492
  %746 = vmatprep.subr.bf16.mxu0 0
  %747 = vmatpush1.bf16.msra.mxu0 %v493
  %748 = vmatprep.subr.bf16.mxu0 0
  %749 = vmatpush1.bf16.msra.mxu0 %v494
  %750 = vmatprep.subr.bf16.mxu0 0
  %751 = vmatpush1.bf16.msra.mxu0 %v495
  %752 = vmatprep.subr.bf16.mxu0 0
  %753 = vmatpush1.bf16.msra.mxu0 %v496
  %754 = vmatprep.mubr.bf16.mxu0 %v77
  %755 = vmatmul.mubr.bf16.gmra.mrb[0].mxu0 %v76
  %v756 = vpop.f32.mrb[0].mxu0
  %v757 = vadd.f32 %v596, %v756
  %v758 = vpop.f32.mrb[0].mxu0
  %v759 = vpop.f32.mrb[0].mxu0
  %v760 = vadd.f32 %v599, %v759
  %v761 = vpop.f32.mrb[0].mxu0
  %762 = vmatprep.mubr.bf16.mxu0 %v83
  %763 = vmatmul.mubr.bf16.gmra.mrb[0].mxu0 %v82
  %v764 = vpop.f32.mrb[0].mxu0
  %v765 = vadd.f32 %v604, %v764
  %v766 = vpop.f32.mrb[0].mxu0
  %v767 = vpop.f32.mrb[0].mxu0
  %v768 = vadd.f32 %v607, %v767
  %v769 = vpop.f32.mrb[0].mxu0
  %770 = vmatprep.mubr.bf16.mxu0 %v89
  %771 = vmatmul.mubr.bf16.gmra.mrb[0].mxu0 %v88
  %v772 = vpop.f32.mrb[0].mxu0
  %v773 = vadd.f32 %v612, %v772
  %v774 = vpop.f32.mrb[0].mxu0
  %v775 = vpop.f32.mrb[0].mxu0
  %v776 = vadd.f32 %v615, %v775
  %v777 = vpop.f32.mrb[0].mxu0
  %778 = vmatprep.mubr.bf16.mxu0 %v95
  %779 = vmatmul.mubr.bf16.gmra.mrb[0].mxu0 %v94
  %v780 = vpop.f32.mrb[0].mxu0
  %v781 = vadd.f32 %v620, %v780
  %v782 = vpop.f32.mrb[0].mxu0
  %v783 = vpop.f32.mrb[0].mxu0
  %v784 = vadd.f32 %v623, %v783
  %v785 = vpop.f32.mrb[0].mxu0
  %786 = vmatprep.mubr.bf16.mxu0 %v101
  %787 = vmatmul.mubr.bf16.gmra.mrb[0].mxu0 %v100
  %v788 = vpop.f32.mrb[0].mxu0
  %v789 = vadd.f32 %v628, %v788
  %v790 = vpop.f32.mrb[0].mxu0
  %v791 = vpop.f32.mrb[0].mxu0
  %v792 = vadd.f32 %v631, %v791
  %v793 = vpop.f32.mrb[0].mxu0
  %794 = vmatprep.mubr.bf16.mxu0 %v107
  %795 = vmatmul.mubr.bf16.gmra.mrb[0].mxu0 %v106
  %v796 = vpop.f32.mrb[0].mxu0
  %v797 = vadd.f32 %v636, %v796
  %v798 = vpop.f32.mrb[0].mxu0
  %v799 = vpop.f32.mrb[0].mxu0
  %v800 = vadd.f32 %v639, %v799
  %v801 = vpop.f32.mrb[0].mxu0
  %802 = vmatprep.mubr.bf16.mxu0 %v113
  %803 = vmatmul.mubr.bf16.gmra.mrb[0].mxu0 %v112
  %v804 = vpop.f32.mrb[0].mxu0
  %v805 = vadd.f32 %v644, %v804
  %v806 = vpop.f32.mrb[0].mxu0
  %v807 = vpop.f32.mrb[0].mxu0
  %v808 = vadd.f32 %v647, %v807
  %v809 = vpop.f32.mrb[0].mxu0
  %810 = vmatprep.mubr.bf16.mxu0 %v119
  %811 = vmatmul.mubr.bf16.gmra.mrb[0].mxu0 %v118
  %v812 = vpop.f32.mrb[0].mxu0
  %v813 = vadd.f32 %v652, %v812
  %v814 = vpop.f32.mrb[0].mxu0
  %v815 = vpop.f32.mrb[0].mxu0
  %v816 = vadd.f32 %v655, %v815
  %v817 = vpop.f32.mrb[0].mxu0
  %818 = vmatprep.mubr.bf16.mxu0 %v125
  %819 = vmatmul.mubr.bf16.gmra.mrb[0].mxu0 %v124
  %v820 = vpop.f32.mrb[0].mxu0
  %v821 = vadd.f32 %v660, %v820
  %v822 = vpop.f32.mrb[0].mxu0
  %v823 = vpop.f32.mrb[0].mxu0
  %v824 = vadd.f32 %v663, %v823
  %v825 = vpop.f32.mrb[0].mxu0
  %826 = vmatprep.mubr.bf16.mxu0 %v131
  %827 = vmatmul.mubr.bf16.gmra.mrb[0].mxu0 %v130
  %v828 = vpop.f32.mrb[0].mxu0
  %v829 = vadd.f32 %v668, %v828
  %v830 = vpop.f32.mrb[0].mxu0
  %v831 = vpop.f32.mrb[0].mxu0
  %v832 = vadd.f32 %v671, %v831
  %v833 = vpop.f32.mrb[0].mxu0
  %834 = vmatprep.mubr.bf16.mxu0 %v137
  %835 = vmatmul.mubr.bf16.gmra.mrb[0].mxu0 %v136
  %v836 = vpop.f32.mrb[0].mxu0
  %v837 = vadd.f32 %v676, %v836
  %v838 = vpop.f32.mrb[0].mxu0
  %v839 = vpop.f32.mrb[0].mxu0
  %v840 = vadd.f32 %v679, %v839
  %v841 = vpop.f32.mrb[0].mxu0
  %842 = vmatprep.mubr.bf16.mxu0 %v143
  %843 = vmatmul.mubr.bf16.gmra.mrb[0].mxu0 %v142
  %v844 = vpop.f32.mrb[0].mxu0
  %v845 = vadd.f32 %v684, %v844
  %v846 = vpop.f32.mrb[0].mxu0
  %v847 = vpop.f32.mrb[0].mxu0
  %v848 = vadd.f32 %v687, %v847
  %v849 = vpop.f32.mrb[0].mxu0
  %850 = vmatprep.mubr.bf16.mxu0 %v149
  %851 = vmatmul.mubr.bf16.gmra.mrb[0].mxu0 %v148
  %v852 = vpop.f32.mrb[0].mxu0
  %v853 = vadd.f32 %v692, %v852
  %v854 = vpop.f32.mrb[0].mxu0
  %v855 = vpop.f32.mrb[0].mxu0
  %v856 = vadd.f32 %v695, %v855
  %v857 = vpop.f32.mrb[0].mxu0
  %858 = vmatprep.mubr.bf16.mxu0 %v155
  %859 = vmatmul.mubr.bf16.gmra.mrb[0].mxu0 %v154
  %v860 = vpop.f32.mrb[0].mxu0
  %v861 = vadd.f32 %v700, %v860
  %v862 = vpop.f32.mrb[0].mxu0
  %v863 = vpop.f32.mrb[0].mxu0
  %v864 = vadd.f32 %v703, %v863
  %v865 = vpop.f32.mrb[0].mxu0
  %866 = vmatprep.mubr.bf16.mxu0 %v161
  %867 = vmatmul.mubr.bf16.gmra.mrb[0].mxu0 %v160
  %v868 = vpop.f32.mrb[0].mxu0
  %v869 = vadd.f32 %v708, %v868
  %v870 = vpop.f32.mrb[0].mxu0
  %v871 = vpop.f32.mrb[0].mxu0
  %v872 = vadd.f32 %v711, %v871
  %v873 = vpop.f32.mrb[0].mxu0
  %874 = vmatprep.mubr.bf16.mxu0 %v167
  %875 = vmatmul.mubr.bf16.gmra.mrb[0].mxu0 %v166
  %v876 = vpop.f32.mrb[0].mxu0
  %v877 = vadd.f32 %v716, %v876
  %v878 = vpop.f32.mrb[0].mxu0
  %v879 = vpop.f32.mrb[0].mxu0
  %v880 = vadd.f32 %v719, %v879
  %v881 = vpop.f32.mrb[0].mxu0
  %882 = vdwg.mxu0
  %883 = vmatprep.subr.bf16.mxu0 0
  %884 = vmatpush1.bf16.msra.mxu0 %v497
  %885 = vmatprep.subr.bf16.mxu0 0
  %886 = vmatpush1.bf16.msra.mxu0 %v498
  %887 = vmatprep.subr.bf16.mxu0 0
  %888 = vmatpush1.bf16.msra.mxu0 %v499
  %889 = vmatprep.subr.bf16.mxu0 0
  %890 = vmatpush1.bf16.msra.mxu0 %v500
  %891 = vmatprep.subr.bf16.mxu0 0
  %892 = vmatpush1.bf16.msra.mxu0 %v501
  %893 = vmatprep.subr.bf16.mxu0 0
  %894 = vmatpush1.bf16.msra.mxu0 %v502
  %895 = vmatprep.subr.bf16.mxu0 0
  %896 = vmatpush1.bf16.msra.mxu0 %v503
  %897 = vmatprep.subr.bf16.mxu0 0
  %898 = vmatpush1.bf16.msra.mxu0 %v504
  %899 = vmatprep.subr.bf16.mxu0 0
  %900 = vmatpush1.bf16.msra.mxu0 %v505
  %901 = vmatprep.subr.bf16.mxu0 0
  %902 = vmatpush1.bf16.msra.mxu0 %v506
  %903 = vmatprep.subr.bf16.mxu0 0
  %904 = vmatpush1.bf16.msra.mxu0 %v507
  %905 = vmatprep.subr.bf16.mxu0 0
  %906 = vmatpush1.bf16.msra.mxu0 %v508
  %907 = vmatprep.subr.bf16.mxu0 0
  %908 = vmatpush1.bf16.msra.mxu0 %v509
  %909 = vmatprep.subr.bf16.mxu0 0
  %910 = vmatpush1.bf16.msra.mxu0 %v510
  %911 = vmatprep.subr.bf16.mxu0 0
  %912 = vmatpush1.bf16.msra.mxu0 %v511
  %913 = vmatprep.subr.bf16.mxu0 0
  %914 = vmatpush1.bf16.msra.mxu0 %v512
  %915 = vmatprep.mubr.bf16.mxu0 %v79
  %916 = vmatmul.mubr.bf16.gmra.mrb[0].mxu0 %v78
  %v917 = vpop.f32.mrb[0].mxu0
  %v918 = vadd.f32 %v757, %v917
  %v919 = vpop.f32.mrb[0].mxu0
  %v920 = vpop.f32.mrb[0].mxu0
  %v921 = vadd.f32 %v760, %v920
  %v922 = vpop.f32.mrb[0].mxu0
  %923 = vmatprep.mubr.bf16.mxu0 %v85
  %924 = vmatmul.mubr.bf16.gmra.mrb[0].mxu0 %v84
  %v925 = vpop.f32.mrb[0].mxu0
  %v926 = vadd.f32 %v765, %v925
  %v927 = vpop.f32.mrb[0].mxu0
  %v928 = vpop.f32.mrb[0].mxu0
  %v929 = vadd.f32 %v768, %v928
  %v930 = vpop.f32.mrb[0].mxu0
  %931 = vmatprep.mubr.bf16.mxu0 %v91
  %932 = vmatmul.mubr.bf16.gmra.mrb[0].mxu0 %v90
  %v933 = vpop.f32.mrb[0].mxu0
  %v934 = vadd.f32 %v773, %v933
  %v935 = vpop.f32.mrb[0].mxu0
  %v936 = vpop.f32.mrb[0].mxu0
  %v937 = vadd.f32 %v776, %v936
  %v938 = vpop.f32.mrb[0].mxu0
  %939 = vmatprep.mubr.bf16.mxu0 %v97
  %940 = vmatmul.mubr.bf16.gmra.mrb[0].mxu0 %v96
  %v941 = vpop.f32.mrb[0].mxu0
  %v942 = vadd.f32 %v781, %v941
  %v943 = vpop.f32.mrb[0].mxu0
  %v944 = vpop.f32.mrb[0].mxu0
  %v945 = vadd.f32 %v784, %v944
  %v946 = vpop.f32.mrb[0].mxu0
  %947 = vmatprep.mubr.bf16.mxu0 %v103
  %948 = vmatmul.mubr.bf16.gmra.mrb[0].mxu0 %v102
  %v949 = vpop.f32.mrb[0].mxu0
  %v950 = vadd.f32 %v789, %v949
  %v951 = vpop.f32.mrb[0].mxu0
  %v952 = vpop.f32.mrb[0].mxu0
  %v953 = vadd.f32 %v792, %v952
  %v954 = vpop.f32.mrb[0].mxu0
  %955 = vmatprep.mubr.bf16.mxu0 %v109
  %956 = vmatmul.mubr.bf16.gmra.mrb[0].mxu0 %v108
  %v957 = vpop.f32.mrb[0].mxu0
  %v958 = vadd.f32 %v797, %v957
  %v959 = vpop.f32.mrb[0].mxu0
  %v960 = vpop.f32.mrb[0].mxu0
  %v961 = vadd.f32 %v800, %v960
  %v962 = vpop.f32.mrb[0].mxu0
  %963 = vmatprep.mubr.bf16.mxu0 %v115
  %964 = vmatmul.mubr.bf16.gmra.mrb[0].mxu0 %v114
  %v965 = vpop.f32.mrb[0].mxu0
  %v966 = vadd.f32 %v805, %v965
  %v967 = vpop.f32.mrb[0].mxu0
  %v968 = vpop.f32.mrb[0].mxu0
  %v969 = vadd.f32 %v808, %v968
  %v970 = vpop.f32.mrb[0].mxu0
  %971 = vmatprep.mubr.bf16.mxu0 %v121
  %972 = vmatmul.mubr.bf16.gmra.mrb[0].mxu0 %v120
  %v973 = vpop.f32.mrb[0].mxu0
  %v974 = vadd.f32 %v813, %v973
  %v975 = vpop.f32.mrb[0].mxu0
  %v976 = vpop.f32.mrb[0].mxu0
  %v977 = vadd.f32 %v816, %v976
  %v978 = vpop.f32.mrb[0].mxu0
  %979 = vmatprep.mubr.bf16.mxu0 %v127
  %980 = vmatmul.mubr.bf16.gmra.mrb[0].mxu0 %v126
  %v981 = vpop.f32.mrb[0].mxu0
  %v982 = vadd.f32 %v821, %v981
  %v983 = vpop.f32.mrb[0].mxu0
  %v984 = vpop.f32.mrb[0].mxu0
  %v985 = vadd.f32 %v824, %v984
  %v986 = vpop.f32.mrb[0].mxu0
  %987 = vmatprep.mubr.bf16.mxu0 %v133
  %988 = vmatmul.mubr.bf16.gmra.mrb[0].mxu0 %v132
  %v989 = vpop.f32.mrb[0].mxu0
  %v990 = vadd.f32 %v829, %v989
  %v991 = vpop.f32.mrb[0].mxu0
  %v992 = vpop.f32.mrb[0].mxu0
  %v993 = vadd.f32 %v832, %v992
  %v994 = vpop.f32.mrb[0].mxu0
  %995 = vmatprep.mubr.bf16.mxu0 %v139
  %996 = vmatmul.mubr.bf16.gmra.mrb[0].mxu0 %v138
  %v997 = vpop.f32.mrb[0].mxu0
  %v998 = vadd.f32 %v837, %v997
  %v999 = vpop.f32.mrb[0].mxu0
  %v1000 = vpop.f32.mrb[0].mxu0
  %v1001 = vadd.f32 %v840, %v1000
  %v1002 = vpop.f32.mrb[0].mxu0
  %1003 = vmatprep.mubr.bf16.mxu0 %v145
  %1004 = vmatmul.mubr.bf16.gmra.mrb[0].mxu0 %v144
  %v1005 = vpop.f32.mrb[0].mxu0
  %v1006 = vadd.f32 %v845, %v1005
  %v1007 = vpop.f32.mrb[0].mxu0
  %v1008 = vpop.f32.mrb[0].mxu0
  %v1009 = vadd.f32 %v848, %v1008
  %v1010 = vpop.f32.mrb[0].mxu0
  %1011 = vmatprep.mubr.bf16.mxu0 %v151
  %1012 = vmatmul.mubr.bf16.gmra.mrb[0].mxu0 %v150
  %v1013 = vpop.f32.mrb[0].mxu0
  %v1014 = vadd.f32 %v853, %v1013
  %v1015 = vpop.f32.mrb[0].mxu0
  %v1016 = vpop.f32.mrb[0].mxu0
  %v1017 = vadd.f32 %v856, %v1016
  %v1018 = vpop.f32.mrb[0].mxu0
  %1019 = vmatprep.mubr.bf16.mxu0 %v157
  %1020 = vmatmul.mubr.bf16.gmra.mrb[0].mxu0 %v156
  %v1021 = vpop.f32.mrb[0].mxu0
  %v1022 = vadd.f32 %v861, %v1021
  %v1023 = vpop.f32.mrb[0].mxu0
  %v1024 = vpop.f32.mrb[0].mxu0
  %v1025 = vadd.f32 %v864, %v1024
  %v1026 = vpop.f32.mrb[0].mxu0
  %1027 = vmatprep.mubr.bf16.mxu0 %v163
  %1028 = vmatmul.mubr.bf16.gmra.mrb[0].mxu0 %v162
  %v1029 = vpop.f32.mrb[0].mxu0
  %v1030 = vadd.f32 %v869, %v1029
  %v1031 = vpop.f32.mrb[0].mxu0
  %v1032 = vpop.f32.mrb[0].mxu0
  %v1033 = vadd.f32 %v872, %v1032
  %v1034 = vpop.f32.mrb[0].mxu0
  %1035 = vmatprep.mubr.bf16.mxu0 %v169
  %1036 = vmatmul.mubr.bf16.gmra.mrb[0].mxu0 %v168
  %v1037 = vpop.f32.mrb[0].mxu0
  %v1038 = vadd.f32 %v877, %v1037
  %v1039 = vpop.f32.mrb[0].mxu0
  %v1040 = vpop.f32.mrb[0].mxu0
  %v1041 = vadd.f32 %v880, %v1040
  %v1042 = vpop.f32.mrb[0].mxu0
  %1043 = vdwg.mxu0
  %v1044 = vmax.f32 %v918, 0.0
  %v1045 = vmax.f32 %v921, 0.0
  %v1046 = vmax.f32 %v926, 0.0
  %v1047 = vmax.f32 %v929, 0.0
  %v1048 = vmax.f32 %v934, 0.0
  %v1049 = vmax.f32 %v937, 0.0
  %v1050 = vmax.f32 %v942, 0.0
  %v1051 = vmax.f32 %v945, 0.0
  %v1052 = vmax.f32 %v950, 0.0
  %v1053 = vmax.f32 %v953, 0.0
  %v1054 = vmax.f32 %v958, 0.0
  %v1055 = vmax.f32 %v961, 0.0
  %v1056 = vmax.f32 %v966, 0.0
  %v1057 = vmax.f32 %v969, 0.0
  %v1058 = vmax.f32 %v974, 0.0
  %v1059 = vmax.f32 %v977, 0.0
  %v1060 = vmax.f32 %v982, 0.0
  %v1061 = vmax.f32 %v985, 0.0
  %v1062 = vmax.f32 %v990, 0.0
  %v1063 = vmax.f32 %v993, 0.0
  %v1064 = vmax.f32 %v998, 0.0
  %v1065 = vmax.f32 %v1001, 0.0
  %v1066 = vmax.f32 %v1006, 0.0
  %v1067 = vmax.f32 %v1009, 0.0
  %v1068 = vmax.f32 %v1014, 0.0
  %v1069 = vmax.f32 %v1017, 0.0
  %v1070 = vmax.f32 %v1022, 0.0
  %v1071 = vmax.f32 %v1025, 0.0
  %v1072 = vmax.f32 %v1030, 0.0
  %v1073 = vmax.f32 %v1033, 0.0
  %v1074 = vmax.f32 %v1038, 0.0
  %v1075 = vmax.f32 %v1041, 0.0
  %v1076 = vmin.f32 %v1044, 1.0
  %v1077 = vmin.f32 %v1045, 1.0
  %v1078 = vmin.f32 %v1046, 1.0
  %v1079 = vmin.f32 %v1047, 1.0
  %v1080 = vmin.f32 %v1048, 1.0
  %v1081 = vmin.f32 %v1049, 1.0
  %v1082 = vmin.f32 %v1050, 1.0
  %v1083 = vmin.f32 %v1051, 1.0
  %v1084 = vmin.f32 %v1052, 1.0
  %v1085 = vmin.f32 %v1053, 1.0
  %v1086 = vmin.f32 %v1054, 1.0
  %v1087 = vmin.f32 %v1055, 1.0
  %v1088 = vmin.f32 %v1056, 1.0
  %v1089 = vmin.f32 %v1057, 1.0
  %v1090 = vmin.f32 %v1058, 1.0
  %v1091 = vmin.f32 %v1059, 1.0
  %v1092 = vmin.f32 %v1060, 1.0
  %v1093 = vmin.f32 %v1061, 1.0
  %v1094 = vmin.f32 %v1062, 1.0
  %v1095 = vmin.f32 %v1063, 1.0
  %v1096 = vmin.f32 %v1064, 1.0
  %v1097 = vmin.f32 %v1065, 1.0
  %v1098 = vmin.f32 %v1066, 1.0
  %v1099 = vmin.f32 %v1067, 1.0
  %v1100 = vmin.f32 %v1068, 1.0
  %v1101 = vmin.f32 %v1069, 1.0
  %v1102 = vmin.f32 %v1070, 1.0
  %v1103 = vmin.f32 %v1071, 1.0
  %v1104 = vmin.f32 %v1072, 1.0
  %v1105 = vmin.f32 %v1073, 1.0
  %v1106 = vmin.f32 %v1074, 1.0
  %v1107 = vmin.f32 %v1075, 1.0
  %v1108 = vld [vmem:[%s3] sm:$0x1]
  %v1110 = vlaneseq
  %v1111 = vshrl.u32 %v1110, 7
  %v1112 = vsub.s32 0, %v1111
  %v1113 = vrot.slane %v1108, %v1112
  %v1115 = vmul.f32 %v1076, %v1113
  %v1116 = vmul.f32 %v1077, %v1113
  %v1117 = vmul.f32 %v1078, %v1113
  %v1118 = vmul.f32 %v1079, %v1113
  %v1119 = vmul.f32 %v1080, %v1113
  %v1120 = vmul.f32 %v1081, %v1113
  %v1121 = vmul.f32 %v1082, %v1113
  %v1122 = vmul.f32 %v1083, %v1113
  %v1123 = vmul.f32 %v1084, %v1113
  %v1124 = vmul.f32 %v1085, %v1113
  %v1125 = vmul.f32 %v1086, %v1113
  %v1126 = vmul.f32 %v1087, %v1113
  %v1127 = vmul.f32 %v1088, %v1113
  %v1128 = vmul.f32 %v1089, %v1113
  %v1129 = vmul.f32 %v1090, %v1113
  %v1130 = vmul.f32 %v1091, %v1113
  %v1131 = vld [vmem:[%s4] sm:$0x1]
  %v1133 = vlaneseq
  %v1134 = vshrl.u32 %v1133, 7
  %v1135 = vsub.s32 0, %v1134
  %v1136 = vrot.slane %v1131, %v1135
  %v1138 = vmul.f32 %v1092, %v1136
  %v1139 = vmul.f32 %v1093, %v1136
  %v1140 = vmul.f32 %v1094, %v1136
  %v1141 = vmul.f32 %v1095, %v1136
  %v1142 = vmul.f32 %v1096, %v1136
  %v1143 = vmul.f32 %v1097, %v1136
  %v1144 = vmul.f32 %v1098, %v1136
  %v1145 = vmul.f32 %v1099, %v1136
  %v1146 = vmul.f32 %v1100, %v1136
  %v1147 = vmul.f32 %v1101, %v1136
  %v1148 = vmul.f32 %v1102, %v1136
  %v1149 = vmul.f32 %v1103, %v1136
  %v1150 = vmul.f32 %v1104, %v1136
  %v1151 = vmul.f32 %v1105, %v1136
  %v1152 = vmul.f32 %v1106, %v1136
  %v1153 = vmul.f32 %v1107, %v1136
  %v1154 = vadd.f32 %v1115, %v1138
  %v1155 = vadd.f32 %v1116, %v1139
  %v1156 = vadd.f32 %v1117, %v1140
  %v1157 = vadd.f32 %v1118, %v1141
  %v1158 = vadd.f32 %v1119, %v1142
  %v1159 = vadd.f32 %v1120, %v1143
  %v1160 = vadd.f32 %v1121, %v1144
  %v1161 = vadd.f32 %v1122, %v1145
  %v1162 = vadd.f32 %v1123, %v1146
  %v1163 = vadd.f32 %v1124, %v1147
  %v1164 = vadd.f32 %v1125, %v1148
  %v1165 = vadd.f32 %v1126, %v1149
  %v1166 = vadd.f32 %v1127, %v1150
  %v1167 = vadd.f32 %v1128, %v1151
  %v1168 = vadd.f32 %v1129, %v1152
  %v1169 = vadd.f32 %v1130, %v1153
  %vm1170 = vcmask 261120
  %v1171 = vsel %vm1170, %v1154, 0.0
  %1172 = vadd.xlane.f32.xlu0 %v1171
  %v1173 = vpop.xlane.xlu0 %1172
  %v1174 = vsel %vm1170, %v1155, 0.0
  %1175 = vadd.xlane.f32.xlu0 %v1174
  %v1176 = vpop.xlane.xlu0 %1175
  %v1177 = vsel %vm1170, %v1156, 0.0
  %1178 = vadd.xlane.f32.xlu0 %v1177
  %v1179 = vpop.xlane.xlu0 %1178
  %v1180 = vsel %vm1170, %v1157, 0.0
  %1181 = vadd.xlane.f32.xlu0 %v1180
  %v1182 = vpop.xlane.xlu0 %1181
  %v1183 = vsel %vm1170, %v1158, 0.0
  %1184 = vadd.xlane.f32.xlu0 %v1183
  %v1185 = vpop.xlane.xlu0 %1184
  %v1186 = vsel %vm1170, %v1159, 0.0
  %1187 = vadd.xlane.f32.xlu0 %v1186
  %v1188 = vpop.xlane.xlu0 %1187
  %v1189 = vsel %vm1170, %v1160, 0.0
  %1190 = vadd.xlane.f32.xlu0 %v1189
  %v1191 = vpop.xlane.xlu0 %1190
  %v1192 = vsel %vm1170, %v1161, 0.0
  %1193 = vadd.xlane.f32.xlu0 %v1192
  %v1194 = vpop.xlane.xlu0 %1193
  %v1195 = vsel %vm1170, %v1162, 0.0
  %1196 = vadd.xlane.f32.xlu0 %v1195
  %v1197 = vpop.xlane.xlu0 %1196
  %v1198 = vsel %vm1170, %v1163, 0.0
  %1199 = vadd.xlane.f32.xlu0 %v1198
  %v1200 = vpop.xlane.xlu0 %1199
  %v1201 = vsel %vm1170, %v1164, 0.0
  %1202 = vadd.xlane.f32.xlu0 %v1201
  %v1203 = vpop.xlane.xlu0 %1202
  %v1204 = vsel %vm1170, %v1165, 0.0
  %1205 = vadd.xlane.f32.xlu0 %v1204
  %v1206 = vpop.xlane.xlu0 %1205
  %v1207 = vsel %vm1170, %v1166, 0.0
  %1208 = vadd.xlane.f32.xlu0 %v1207
  %v1209 = vpop.xlane.xlu0 %1208
  %v1210 = vsel %vm1170, %v1167, 0.0
  %1211 = vadd.xlane.f32.xlu0 %v1210
  %v1212 = vpop.xlane.xlu0 %1211
  %v1213 = vsel %vm1170, %v1168, 0.0
  %1214 = vadd.xlane.f32.xlu0 %v1213
  %v1215 = vpop.xlane.xlu0 %1214
  %v1216 = vsel %vm1170, %v1169, 0.0
  %1217 = vadd.xlane.f32.xlu0 %v1216
  %v1218 = vpop.xlane.xlu0 %1217
  %v1219 = vld [vmem:[#allocation2] sm:$0x1]
  %v1221 = vlaneseq
  %v1222 = vshrl.u32 %v1221, 7
  %v1223 = vsub.s32 0, %v1222
  %v1224 = vrot.slane %v1219, %v1223
  %v1226 = vadd.f32 %v1173, %v1224
  %v1227 = vadd.f32 %v1176, %v1224
  %v1228 = vadd.f32 %v1179, %v1224
  %v1229 = vadd.f32 %v1182, %v1224
  %v1230 = vadd.f32 %v1185, %v1224
  %v1231 = vadd.f32 %v1188, %v1224
  %v1232 = vadd.f32 %v1191, %v1224
  %v1233 = vadd.f32 %v1194, %v1224
  %v1234 = vadd.f32 %v1197, %v1224
  %v1235 = vadd.f32 %v1200, %v1224
  %v1236 = vadd.f32 %v1203, %v1224
  %v1237 = vadd.f32 %v1206, %v1224
  %v1238 = vadd.f32 %v1209, %v1224
  %v1239 = vadd.f32 %v1212, %v1224
  %v1240 = vadd.f32 %v1215, %v1224
  %v1241 = vadd.f32 %v1218, %v1224
  %v1242 = vxor.u32 %v1226, 2147483648
  %v1243 = vxor.u32 %v1227, 2147483648
  %v1244 = vxor.u32 %v1228, 2147483648
  %v1245 = vxor.u32 %v1229, 2147483648
  %v1246 = vxor.u32 %v1230, 2147483648
  %v1247 = vxor.u32 %v1231, 2147483648
  %v1248 = vxor.u32 %v1232, 2147483648
  %v1249 = vxor.u32 %v1233, 2147483648
  %v1250 = vxor.u32 %v1234, 2147483648
  %v1251 = vxor.u32 %v1235, 2147483648
  %v1252 = vxor.u32 %v1236, 2147483648
  %v1253 = vxor.u32 %v1237, 2147483648
  %v1254 = vxor.u32 %v1238, 2147483648
  %v1255 = vxor.u32 %v1239, 2147483648
  %v1256 = vxor.u32 %v1240, 2147483648
  %v1257 = vxor.u32 %v1241, 2147483648
  %v1258 = vmul.f32 %v1242, 1.442695
  %v1259 = vpow.pop %v1258
  %v1260 = vmul.f32 %v1243, 1.442695
  %v1261 = vpow.pop %v1260
  %v1262 = vmul.f32 %v1244, 1.442695
  %v1263 = vpow.pop %v1262
  %v1264 = vmul.f32 %v1245, 1.442695
  %v1265 = vpow.pop %v1264
  %v1266 = vmul.f32 %v1246, 1.442695
  %v1267 = vpow.pop %v1266
  %v1268 = vmul.f32 %v1247, 1.442695
  %v1269 = vpow.pop %v1268
  %v1270 = vmul.f32 %v1248, 1.442695
  %v1271 = vpow.pop %v1270
  %v1272 = vmul.f32 %v1249, 1.442695
  %v1273 = vpow.pop %v1272
  %v1274 = vmul.f32 %v1250, 1.442695
  %v1275 = vpow.pop %v1274
  %v1276 = vmul.f32 %v1251, 1.442695
  %v1277 = vpow.pop %v1276
  %v1278 = vmul.f32 %v1252, 1.442695
  %v1279 = vpow.pop %v1278
  %v1280 = vmul.f32 %v1253, 1.442695
  %v1281 = vpow.pop %v1280
  %v1282 = vmul.f32 %v1254, 1.442695
  %v1283 = vpow.pop %v1282
  %v1284 = vmul.f32 %v1255, 1.442695
  %v1285 = vpow.pop %v1284
  %v1286 = vmul.f32 %v1256, 1.442695
  %v1287 = vpow.pop %v1286
  %v1288 = vmul.f32 %v1257, 1.442695
  %v1289 = vpow.pop %v1288
  %v1290 = vadd.f32 %v1259, 1.0
  %v1291 = vadd.f32 %v1261, 1.0
  %v1292 = vadd.f32 %v1263, 1.0
  %v1293 = vadd.f32 %v1265, 1.0
  %v1294 = vadd.f32 %v1267, 1.0
  %v1295 = vadd.f32 %v1269, 1.0
  %v1296 = vadd.f32 %v1271, 1.0
  %v1297 = vadd.f32 %v1273, 1.0
  %v1298 = vadd.f32 %v1275, 1.0
  %v1299 = vadd.f32 %v1277, 1.0
  %v1300 = vadd.f32 %v1279, 1.0
  %v1301 = vadd.f32 %v1281, 1.0
  %v1302 = vadd.f32 %v1283, 1.0
  %v1303 = vadd.f32 %v1285, 1.0
  %v1304 = vadd.f32 %v1287, 1.0
  %v1305 = vadd.f32 %v1289, 1.0
  %v1306 = vrcp.pop %v1290
  %v1307 = vmul.f32 1.0, %v1306
  %v1308 = vrcp.pop %v1291
  %v1309 = vmul.f32 1.0, %v1308
  %v1310 = vrcp.pop %v1292
  %v1311 = vmul.f32 1.0, %v1310
  %v1312 = vrcp.pop %v1293
  %v1313 = vmul.f32 1.0, %v1312
  %v1314 = vrcp.pop %v1294
  %v1315 = vmul.f32 1.0, %v1314
  %v1316 = vrcp.pop %v1295
  %v1317 = vmul.f32 1.0, %v1316
  %v1318 = vrcp.pop %v1296
  %v1319 = vmul.f32 1.0, %v1318
  %v1320 = vrcp.pop %v1297
  %v1321 = vmul.f32 1.0, %v1320
  %v1322 = vrcp.pop %v1298
  %v1323 = vmul.f32 1.0, %v1322
  %v1324 = vrcp.pop %v1299
  %v1325 = vmul.f32 1.0, %v1324
  %v1326 = vrcp.pop %v1300
  %v1327 = vmul.f32 1.0, %v1326
  %v1328 = vrcp.pop %v1301
  %v1329 = vmul.f32 1.0, %v1328
  %v1330 = vrcp.pop %v1302
  %v1331 = vmul.f32 1.0, %v1330
  %v1332 = vrcp.pop %v1303
  %v1333 = vmul.f32 1.0, %v1332
  %v1334 = vrcp.pop %v1304
  %v1335 = vmul.f32 1.0, %v1334
  %v1336 = vrcp.pop %v1305
  %v1337 = vmul.f32 1.0, %v1336
  %vm1338 = vcmask 7168
  %1339 = vst.msk [vmem:[%s6] sm:$0xff] %vm1338, %v1307
  %1340 = vst.msk [vmem:[%s6 + $0x8] sm:$0xff] %vm1338, %v1309
  %1341 = vst.msk [vmem:[%s6 + $0x10] sm:$0xff] %vm1338, %v1311
  %1342 = vst.msk [vmem:[%s6 + $0x18] sm:$0xff] %vm1338, %v1313
  %1343 = vst.msk [vmem:[%s6 + $0x20] sm:$0xff] %vm1338, %v1315
  %1344 = vst.msk [vmem:[%s6 + $0x28] sm:$0xff] %vm1338, %v1317
  %1345 = vst.msk [vmem:[%s6 + $0x30] sm:$0xff] %vm1338, %v1319
  %1346 = vst.msk [vmem:[%s6 + $0x38] sm:$0xff] %vm1338, %v1321
  %1347 = vst.msk [vmem:[%s6 + $0x40] sm:$0xff] %vm1338, %v1323
  %1348 = vst.msk [vmem:[%s6 + $0x48] sm:$0xff] %vm1338, %v1325
  %1349 = vst.msk [vmem:[%s6 + $0x50] sm:$0xff] %vm1338, %v1327
  %1350 = vst.msk [vmem:[%s6 + $0x58] sm:$0xff] %vm1338, %v1329
  %1351 = vst.msk [vmem:[%s6 + $0x60] sm:$0xff] %vm1338, %v1331
  %1352 = vst.msk [vmem:[%s6 + $0x68] sm:$0xff] %vm1338, %v1333
  %1353 = vst.msk [vmem:[%s6 + $0x70] sm:$0xff] %vm1338, %v1335
  %1354 = vst.msk [vmem:[%s6 + $0x78] sm:$0xff] %vm1338, %v1337
  // Predicated region
  $region26: #{tpu_custom_call.1} parent=0 // pred_check
    _
  $region27: #{tpu_custom_call.1} parent=0 // pred_check_branch
    %1356 = sbr.rel (0) target = $region29
  $region28: #{tpu_custom_call.1} parent=0 // pred_region
    _
  $region29: #{tpu_custom_call.1} parent=0 // pred_fallthru
    _
  // Predicated region
  $region30: #{tpu_custom_call.1} parent=0 // pred_check
    _
  $region31: #{tpu_custom_call.1} parent=0 // pred_check_branch
    %1358 = sbr.rel (0) target = $region33
  $region32: #{tpu_custom_call.1} parent=0 // pred_region
    _
  $region33: #{tpu_custom_call.1} parent=0 // pred_fallthru
    _

</llo_original>
